<compile_context>
chip_gen: v7x
topology: tpu7x:2x2x1
jax: 0.10.0
libtpu: 0.0.40
codegen_flags: <defaults>
</compile_context>

<pallas_src>
import jax
import jax.numpy as jnp
from jax.experimental import pallas as pl
from jax.experimental.pallas import tpu as pltpu


def _mask_kernel(labels_ref, w_ref, x_ref, o_ref):
    # labels_ref: (TB, 1) int32  -- labels for this batch tile (VMEM)
    # w_ref:      (P, A)  f32    -- full weight table, VMEM-resident
    # x_ref:      (TB, A) f32
    # o_ref:      (TB, A) f32
    labels = labels_ref[...]                                   # (TB, 1)
    tb = labels.shape[0]
    p = w_ref.shape[0]

    # One-hot selector built on the VPU, gather executed on the MXU.
    patch_ids = jax.lax.broadcasted_iota(jnp.int32, (tb, p), 1)        # (TB, P)
    one_hot = (labels == patch_ids).astype(jnp.float32)                # (TB, P)
    gathered = jnp.dot(one_hot, w_ref[...],
                       preferred_element_type=jnp.float32)             # (TB, A)

    o_ref[...] = (gathered * x_ref[...]).astype(o_ref.dtype)


def mask_forward(weight, x, labels, *, block_rows=512):
    """weight: (P, A) f32, x: (B, A) f32, labels: (B,) int -> (B, A) f32."""
    B, A = x.shape
    P, A_w = weight.shape
    assert A == A_w, "action_space mismatch"

    # Batch tile: multiple of 8 (f32 sublane) when possible, capped by B.
    TB = min(block_rows, B)
    if TB >= 8:
        TB = (TB // 8) * 8
    else:
        TB = B  # block equals full array dim -> allowed even if < 8
    grid = (pl.cdiv(B, TB),)

    labels2d = labels.reshape(B, 1).astype(jnp.int32)

    return pl.pallas_call(
        _mask_kernel,
        grid=grid,
        in_specs=[
            # labels for this batch tile
            pl.BlockSpec((TB, 1), lambda i: (i, 0)),
            # full weight table, constant block index -> fetched once, stays in VMEM
            pl.BlockSpec((P, A), lambda i: (0, 0)),
            # x tile
            pl.BlockSpec((TB, A), lambda i: (i, 0)),
        ],
        out_specs=pl.BlockSpec((TB, A), lambda i: (i, 0)),
        out_shape=jax.ShapeDtypeStruct((B, A), x.dtype),
        compiler_params=pltpu.CompilerParams(
            # Each output block is written exactly once and blocks are
            # independent -> shard the batch axis across TensorCores (v7x).
            dimension_semantics=("parallel",),
        ),
    )(labels2d, weight, x)


if __name__ == "__main__":
    # Small, deterministic example shapes consistent with the module.
    num_patches = 16          # rows in the learned mask table
    action_space = 128        # lane-friendly action dimension
    batch = 256               # number of (x, label) pairs

    key = jax.random.PRNGKey(0)
    kx, kl = jax.random.split(key)

    # Deterministic parameter init, exactly as in Mask.__init__:
    # weight.data.fill_(1 / action_space)
    weight = jnp.full((num_patches, action_space), 1.0 / action_space,
                      dtype=jnp.float32)

    x = jax.random.normal(kx, (batch, action_space), dtype=jnp.float32)
    labels = jax.random.randint(kl, (batch,), 0, num_patches, dtype=jnp.int32)

    # block_rows=128 -> 2 grid steps at this small batch, exercising the pipeline.
    out = mask_forward(weight, x, labels, block_rows=128)
    out = jax.block_until_ready(out)

    # Pure-JAX reference: weight[labels] * x
    ref = weight[labels] * x
    assert out.shape == (batch, action_space)
    assert jnp.allclose(out, ref, atol=1e-6, rtol=1e-6)

    print("KERNEL_OK")
</pallas_src>

<mosaic_0001>
module attributes {stable_mosaic.version = 11 : i64} {
  func.func @_mask_kernel(%arg0: i32, %arg1: memref<128x1xi32, #tpu.memory_space<vmem>>, %arg2: memref<16x128xf32, #tpu.memory_space<vmem>>, %arg3: memref<128x128xf32, #tpu.memory_space<vmem>>, %arg4: memref<128x128xf32, #tpu.memory_space<vmem>>) attributes {dimension_semantics = [#tpu.dimension_semantics<parallel>], iteration_bounds = array<i64: 2>, scalar_prefetch = 0 : i64, scratch_operands = 0 : i64, tpu.core_type = #tpu.core_type<tc>, window_params = [{transform_indices = @transform_0, window_bounds = array<i64: 128, 1>}, {pipeline_mode = #tpu.pipeline_mode<synchronous>, transform_indices = @transform_1, window_bounds = array<i64: 16, 128>}, {transform_indices = @transform_2, window_bounds = array<i64: 128, 128>}, {transform_indices = @transform_3, window_bounds = array<i64: 128, 128>}]} {
    %c0 = arith.constant 0 : index
    %c0_0 = arith.constant 0 : index
    %0 = vector.load %arg1[%c0, %c0_0] : memref<128x1xi32, #tpu.memory_space<vmem>>, vector<128x1xi32>
    %1 = tpu.iota {dimensions = array<i32: 1>} : vector<128x16xi32>
    %2 = vector.broadcast %0 : vector<128x1xi32> to vector<128x16xi32>
    %3 = arith.cmpi eq, %2, %1 : vector<128x16xi32>
    %4 = arith.extui %3 : vector<128x16xi1> to vector<128x16xi32>
    %5 = arith.sitofp %4 : vector<128x16xi32> to vector<128x16xf32>
    %c0_1 = arith.constant 0 : index
    %c0_2 = arith.constant 0 : index
    %6 = vector.load %arg2[%c0_1, %c0_2] : memref<16x128xf32, #tpu.memory_space<vmem>>, vector<16x128xf32>
    %cst = arith.constant dense<0.000000e+00> : vector<128x128xf32>
    %7 = tpu.matmul %5, %6, %cst {dimension_numbers = #tpu.dot_dimension_numbers<[1], [0], [0], [1], [0, 0, 1, 1], [], []>} : vector<128x16xf32>, vector<16x128xf32>, vector<128x128xf32> -> vector<128x128xf32>
    %c0_3 = arith.constant 0 : index
    %c0_4 = arith.constant 0 : index
    %8 = vector.load %arg3[%c0_3, %c0_4] : memref<128x128xf32, #tpu.memory_space<vmem>>, vector<128x128xf32>
    %9 = arith.mulf %7, %8 : vector<128x128xf32>
    %c0_5 = arith.constant 0 : index
    %c0_6 = arith.constant 0 : index
    %10 = vector.load %arg4[%c0_5, %c0_6] : memref<128x128xf32, #tpu.memory_space<vmem>>, vector<128x128xf32>
    tpu.vector_store %arg4[%c0_5, %c0_6], %9 {strides = array<i32>} : memref<128x128xf32, #tpu.memory_space<vmem>>, vector<128x128xf32>,
    return
  }
  func.func @transform_0(%arg0: i32) -> (i32, i32) {
    %c0_i32 = arith.constant 0 : i32
    %c0_i32_0 = arith.constant 0 : i32
    return %arg0, %c0_i32 : i32, i32
  }
  func.func @transform_1(%arg0: i32) -> (i32, i32) {
    %c0_i32 = arith.constant 0 : i32
    %c0_i32_0 = arith.constant 0 : i32
    %c0_i32_1 = arith.constant 0 : i32
    return %c0_i32, %c0_i32_0 : i32, i32
  }
  func.func @transform_2(%arg0: i32) -> (i32, i32) {
    %c0_i32 = arith.constant 0 : i32
    %c0_i32_0 = arith.constant 0 : i32
    return %arg0, %c0_i32 : i32, i32
  }
  func.func @transform_3(%arg0: i32) -> (i32, i32) {
    %c0_i32 = arith.constant 0 : i32
    %c0_i32_0 = arith.constant 0 : i32
    return %arg0, %c0_i32 : i32, i32
  }
}

</mosaic_0001>

<llo_original>
// kernel: tpu_custom_call.1
$region0: #{tpu_custom_call.1}
  #allocation0 [shape = 'u32[]', space=smem, size = 0x4, offset = 0x4, fixed_abs, tag = 'smem constant byte address 0x4 - core index']
  #allocation1 [shape = 'u32[144,128]{1,0:T(1,128)}', space=vmem, size = 0x12000, scoped, tag = 'internal scratch']
  %s0 = inlined_call_operand.vmem [shape: s32[256,1], index: 0, kind: input, shape index: {}]
  %s1 = inlined_call_operand.hbm [shape: f32[16,128], index: 1, kind: input, shape index: {}]
  %s2 = inlined_call_operand.vmem [shape: f32[256,128], index: 2, kind: input, shape index: {}]
  %s3 = inlined_call_operand.hbm [shape: f32[256,128], index: 3, kind: output, shape index: {}]
  %s4 = sld [smem:[#allocation0]]
  $region49: #{tpu_custom_call.1} parent=0
    _
  %s6 = ssub.s32 1, %s4
  %s7 = scalar_select 0, %s6, %s4
  $region1: #{tpu_custom_call.1} parent=0
    #allocation2 [shape = 'u8[8192]{0}', space=vmem, size = 0x2000, scoped, tag = 'input window, operand 1, single buffered']
    #allocation3 [shape = 's32[2]{0}', space=sflag, size = 0x8, scoped, tag = 'scoped memory for tpu_custom_call.1']
    #allocation4 [shape = 's32[2]{0}', space=sflag, size = 0x8, scoped, tag = 'scoped memory for tpu_custom_call.1']
    #allocation5 [shape = 'u8[131072]{0}', space=vmem, size = 0x20000, scoped, tag = 'output window, operand 0']
    %8 = vsyncpa [#allocation3], 0
    %9 = vsyncpa [#allocation4], 0
    %s10 = scalar_lea.sflag [#allocation4], 1
    %11 = vsyncpa %s10, 0
    loop: start=0, step=1, limit=4
    $region2: #{tpu_custom_call.1} parent=1 // loop_pre_header
      _
    $region3: #{tpu_custom_call.1} parent=1 // loop_header
      %s13 = sphi 0, %s17
      %p14 = scmp.ge.s32.totalorder %s13, 4
      %s23 = sphi 0, %s25
      %s26 = sphi 0, %s23
      %s27 = sphi 0, %s26
      %s43 = sphi 0, %s27
      %s47 = sphi 0, %s47
      %s49 = sphi 0, %s47
      %s50 = sphi 0, %s49
      %s64 = sphi 0, %s50
      %s70 = sphi 0, %s72
      %s73 = sphi 0, %s70
      %s74 = sphi 0, %s73
      %s90 = sphi 0, %s74
      %s96 = sphi 0, %s98
      %s99 = sphi 0, %s96
      %s100 = sphi 0, %s99
      %s116 = sphi 0, %s100
    $region4: #{tpu_custom_call.1} parent=1 // loop_header_branch
      %16 = sbr.rel (%p14) target = $region8
    $region5: #{tpu_custom_call.1} parent=1 // loop_body
      %s18 = ssub.s32 %s13, 1
      %s19 = ssub.s32 %s13, 2
      %s20 = sadd.s32 %s13, 1
      %s21 = ssub.s32 %s13, %s20
      %p22 = scmp.eq.s32.totalorder %s21, 0
      %s24 = sadd.s32 %s23, 1
      %s25 = scalar_select %p22, %s23, %s24
      %p28 = pneg %p22
      %p29 = scmp.eq.s32.totalorder %s13, 1
      %p30 = por %p28, %p29
      %p31 = scmp.ne.s32.totalorder %s23, %s26
      %p32 = scmp.eq.s32.totalorder %s13, 0
      %p33 = por %p31, %p32
      %p34 = scmp.ne.s32.totalorder %s23, %s26
      %p35 = scmp.eq.s32.totalorder %s18, 1
      %p36 = por %p34, %p35
      %p37 = scmp.ne.s32.totalorder %s26, %s27
      %p38 = scmp.eq.s32.totalorder %s18, 0
      %p39 = por %p37, %p38
      %p40 = scmp.ne.s32.totalorder %s26, %s27
      %p41 = scmp.eq.s32.totalorder %s19, 1
      %p42 = por %p40, %p41
      %p44 = scmp.ne.s32.totalorder %s27, %s43
      %p45 = scmp.eq.s32.totalorder %s19, 0
      %p46 = por %p44, %p45
      %s48 = sadd.s32 %s47, 1
      %p51 = scmp.eq.s32.totalorder %s13, 1
      %p52 = scmp.ne.s32.totalorder %s47, %s49
      %p53 = scmp.eq.s32.totalorder %s13, 0
      %p54 = por %p52, %p53
      %p55 = scmp.ne.s32.totalorder %s47, %s49
      %p56 = scmp.eq.s32.totalorder %s18, 1
      %p57 = por %p55, %p56
      %p58 = scmp.ne.s32.totalorder %s49, %s50
      %p59 = scmp.eq.s32.totalorder %s18, 0
      %p60 = por %p58, %p59
      %p61 = scmp.ne.s32.totalorder %s49, %s50
      %p62 = scmp.eq.s32.totalorder %s19, 1
      %p63 = por %p61, %p62
      %p65 = scmp.ne.s32.totalorder %s50, %s64
      %p66 = scmp.eq.s32.totalorder %s19, 0
      %p67 = por %p65, %p66
      %s68 = ssub.s32 %s13, %s20
      %p69 = scmp.eq.s32.totalorder %s68, 0
      %s71 = sadd.s32 %s70, 1
      %s72 = scalar_select %p69, %s70, %s71
      %p75 = pneg %p69
      %p76 = scmp.eq.s32.totalorder %s13, 1
      %p77 = por %p75, %p76
      %p78 = scmp.ne.s32.totalorder %s70, %s73
      %p79 = scmp.eq.s32.totalorder %s13, 0
      %p80 = por %p78, %p79
      %p81 = scmp.ne.s32.totalorder %s70, %s73
      %p82 = scmp.eq.s32.totalorder %s18, 1
      %p83 = por %p81, %p82
      %p84 = scmp.ne.s32.totalorder %s73, %s74
      %p85 = scmp.eq.s32.totalorder %s18, 0
      %p86 = por %p84, %p85
      %p87 = scmp.ne.s32.totalorder %s73, %s74
      %p88 = scmp.eq.s32.totalorder %s19, 1
      %p89 = por %p87, %p88
      %p91 = scmp.ne.s32.totalorder %s74, %s90
      %p92 = scmp.eq.s32.totalorder %s19, 0
      %p93 = por %p91, %p92
      %s94 = ssub.s32 %s13, %s20
      %p95 = scmp.eq.s32.totalorder %s94, 0
      %s97 = sadd.s32 %s96, 1
      %s98 = scalar_select %p95, %s96, %s97
      %p101 = pneg %p95
      %p102 = scmp.eq.s32.totalorder %s13, 1
      %p103 = por %p101, %p102
      %p104 = scmp.ne.s32.totalorder %s96, %s99
      %p105 = scmp.eq.s32.totalorder %s13, 0
      %p106 = por %p104, %p105
      %p107 = scmp.ne.s32.totalorder %s96, %s99
      %p108 = scmp.eq.s32.totalorder %s18, 1
      %p109 = por %p107, %p108
      %p110 = scmp.ne.s32.totalorder %s99, %s100
      %p111 = scmp.eq.s32.totalorder %s18, 0
      %p112 = por %p110, %p111
      %p113 = scmp.ne.s32.totalorder %s99, %s100
      %p114 = scmp.eq.s32.totalorder %s19, 1
      %p115 = por %p113, %p114
      %p117 = scmp.ne.s32.totalorder %s100, %s116
      %p118 = scmp.eq.s32.totalorder %s19, 0
      %p119 = por %p117, %p118
      %p120 = scmp.le.s32.totalorder 1, %s13
      %p121 = scmp.lt.s32.totalorder %s13, 3
      %p122 = pnand %p120, %p121
      %p123 = pneg %p122
      // Predicated region
      $region9: #{tpu_custom_call.1} parent=5 // pred_check
        _
      $region10: #{tpu_custom_call.1} parent=5 // pred_check_branch
        %125 = sbr.rel (%p122) target = $region12
      $region11: #{tpu_custom_call.1} parent=5 // pred_region
        %s126 = ssub.s32 %s13, 1
        // Predicated region
        $region13: #{tpu_custom_call.1} parent=11 // pred_check
          %p127 = pneg %p60
        $region14: #{tpu_custom_call.1} parent=11 // pred_check_branch
          %129 = sbr.rel (%p127) target = $region16
        $region15: #{tpu_custom_call.1} parent=11 // pred_region
          %s131 = ssub.s32 256, 256
          %132 = vsyncadd [#allocation3], %s131
          %s133 = sshll.u32 [#allocation2], 4
          %s134 = int_to_ptr.vmem [resolvable:$true] %s133
          %139 = dma.hbm_to_vmem [thread:$0]  %s1, 256, %s134, [#allocation3], 128, 128, 8
        $region16: #{tpu_custom_call.1} parent=11 // pred_fallthru
          _
      $region12: #{tpu_custom_call.1} parent=5 // pred_fallthru
        _
      %p140 = scmp.lt.s32.totalorder %s13, 2
      // Predicated region
      $region17: #{tpu_custom_call.1} parent=5 // pred_check
        %p141 = pneg %p140
      $region18: #{tpu_custom_call.1} parent=5 // pred_check_branch
        %143 = sbr.rel (%p141) target = $region20
      $region19: #{tpu_custom_call.1} parent=5 // pred_region
        // Predicated region
        $region21: #{tpu_custom_call.1} parent=19 // pred_check
          %p144 = pneg %p33
        $region22: #{tpu_custom_call.1} parent=19 // pred_check_branch
          %146 = sbr.rel (%p144) target = $region24
        $region23: #{tpu_custom_call.1} parent=19 // pred_region
          %s147 = smul.u32 16, %s13
          %p148 = scmp.lt.s32.totalorder %s147, 31
          %s149 = scalar_select %p148, %s147, 31
          %s150 = smul.addr %s149, 8
          %s151 = scalar_lea.vmem %s0, %s150
          %s152 = smul.u32 16, %s13
        $region24: #{tpu_custom_call.1} parent=19 // pred_fallthru
          _
        // Predicated region
        $region25: #{tpu_custom_call.1} parent=19 // pred_check
          %p153 = pneg %p80
        $region26: #{tpu_custom_call.1} parent=19 // pred_check_branch
          %155 = sbr.rel (%p153) target = $region28
        $region27: #{tpu_custom_call.1} parent=19 // pred_region
          %s156 = smul.u32 16, %s13
          %p157 = scmp.lt.s32.totalorder %s156, 31
          %s158 = scalar_select %p157, %s156, 31
          %s159 = smul.addr %s158, 8
          %s160 = scalar_lea.vmem %s2, %s159
          %s161 = smul.u32 16, %s13
        $region28: #{tpu_custom_call.1} parent=19 // pred_fallthru
          _
      $region20: #{tpu_custom_call.1} parent=5 // pred_fallthru
        _
      %p162 = scmp.le.s32.totalorder 1, %s13
      %p163 = scmp.lt.s32.totalorder %s13, 3
      %p164 = pnand %p162, %p163
      %p165 = pneg %p164
      // Predicated region
      $region29: #{tpu_custom_call.1} parent=5 // pred_check
        _
      $region30: #{tpu_custom_call.1} parent=5 // pred_check_branch
        %167 = sbr.rel (%p164) target = $region32
      $region31: #{tpu_custom_call.1} parent=5 // pred_region
        %s168 = ssub.s32 %s13, 1
        // Predicated region
        $region33: #{tpu_custom_call.1} parent=31 // pred_check
          %p169 = pneg %p60
        $region34: #{tpu_custom_call.1} parent=31 // pred_check_branch
          %171 = sbr.rel (%p169) target = $region36
        $region35: #{tpu_custom_call.1} parent=31 // pred_region
          %172 = dma.done [#allocation3], 256
        $region36: #{tpu_custom_call.1} parent=31 // pred_fallthru
          _
        %s173 = smul.u32 16, %s18
        %p174 = scmp.lt.s32.totalorder %s173, 31
        %s175 = scalar_select %p174, %s173, 31
        %s176 = smul.addr %s175, 8
        %s177 = scalar_lea.vmem %s0, %s176
        %p178 = pneg %p39
        %p179 = pneg %p36
        %p180 = pneg %p60
        %p181 = pneg %p57
        %s182 = smul.u32 16, %s18
        %p183 = scmp.lt.s32.totalorder %s182, 31
        %s184 = scalar_select %p183, %s182, 31
        %s185 = smul.addr %s184, 8
        %s186 = scalar_lea.vmem %s2, %s185
        %p187 = pneg %p86
        %p188 = pneg %p83
        %p189 = pneg %p112
        %p190 = pneg %p109
        %s191 = sand.u32 %s99, 1
        %s192 = scalar_lea.sflag [#allocation4], %s191
        %s193 = sand.u32 %s99, 1
        %s194 = smul.addr %s193, 128
        %s195 = scalar_lea.vmem [#allocation5], %s194
        %s196 = smul.u32 16, %s18
        %p197 = scmp.lt.s32.totalorder %s196, 31
        %s198 = scalar_select %p197, %s196, 31
        %s199 = smul.addr %s198, 8
        %s200 = scalar_lea.vmem %s0, %s199
        %s201 = smul.u32 16, %s18
        %s202 = smul.u32 16, %s18
        %p203 = scmp.lt.s32.totalorder %s202, 31
        %s204 = scalar_select %p203, %s202, 31
        %s205 = smul.addr %s204, 8
        %s206 = scalar_lea.vmem %s2, %s205
        %s207 = smul.u32 16, %s18
        %s208 = smul.u32 16, %s18
        %v209 = vld [vmem:[%s200] sm:$0xff]
        %v210 = vld [vmem:[%s200 + $0x8] sm:$0xff]
        %v211 = vld [vmem:[%s200 + $0x10] sm:$0xff]
        %v212 = vld [vmem:[%s200 + $0x18] sm:$0xff]
        %v213 = vld [vmem:[%s200 + $0x20] sm:$0xff]
        %v214 = vld [vmem:[%s200 + $0x28] sm:$0xff]
        %v215 = vld [vmem:[%s200 + $0x30] sm:$0xff]
        %v216 = vld [vmem:[%s200 + $0x38] sm:$0xff]
        %v217 = vld [vmem:[%s200 + $0x40] sm:$0xff]
        %v218 = vld [vmem:[%s200 + $0x48] sm:$0xff]
        %v219 = vld [vmem:[%s200 + $0x50] sm:$0xff]
        %v220 = vld [vmem:[%s200 + $0x58] sm:$0xff]
        %v221 = vld [vmem:[%s200 + $0x60] sm:$0xff]
        %v222 = vld [vmem:[%s200 + $0x68] sm:$0xff]
        %v223 = vld [vmem:[%s200 + $0x70] sm:$0xff]
        %v224 = vld [vmem:[%s200 + $0x78] sm:$0xff]
        %v225 = vlaneseq
        %v226 = vand.u32 %v225, 127
        %227 = vset.pattern.permute.xlu0 0
        %228 = vperm.xlu0 %227, %v209
        %v229 = vpop.permute.xlu0 %228
        %230 = vset.pattern.permute.xlu0 0
        %231 = vperm.xlu0 %230, %v210
        %v232 = vpop.permute.xlu0 %231
        %233 = vset.pattern.permute.xlu0 0
        %234 = vperm.xlu0 %233, %v211
        %v235 = vpop.permute.xlu0 %234
        %236 = vset.pattern.permute.xlu0 0
        %237 = vperm.xlu0 %236, %v212
        %v238 = vpop.permute.xlu0 %237
        %239 = vset.pattern.permute.xlu0 0
        %240 = vperm.xlu0 %239, %v213
        %v241 = vpop.permute.xlu0 %240
        %242 = vset.pattern.permute.xlu0 0
        %243 = vperm.xlu0 %242, %v214
        %v244 = vpop.permute.xlu0 %243
        %245 = vset.pattern.permute.xlu0 0
        %246 = vperm.xlu0 %245, %v215
        %v247 = vpop.permute.xlu0 %246
        %248 = vset.pattern.permute.xlu0 0
        %249 = vperm.xlu0 %248, %v216
        %v250 = vpop.permute.xlu0 %249
        %251 = vset.pattern.permute.xlu0 0
        %252 = vperm.xlu0 %251, %v217
        %v253 = vpop.permute.xlu0 %252
        %254 = vset.pattern.permute.xlu0 0
        %255 = vperm.xlu0 %254, %v218
        %v256 = vpop.permute.xlu0 %255
        %257 = vset.pattern.permute.xlu0 0
        %258 = vperm.xlu0 %257, %v219
        %v259 = vpop.permute.xlu0 %258
        %260 = vset.pattern.permute.xlu0 0
        %261 = vperm.xlu0 %260, %v220
        %v262 = vpop.permute.xlu0 %261
        %263 = vset.pattern.permute.xlu0 0
        %264 = vperm.xlu0 %263, %v221
        %v265 = vpop.permute.xlu0 %264
        %266 = vset.pattern.permute.xlu0 0
        %267 = vperm.xlu0 %266, %v222
        %v268 = vpop.permute.xlu0 %267
        %269 = vset.pattern.permute.xlu0 0
        %270 = vperm.xlu0 %269, %v223
        %v271 = vpop.permute.xlu0 %270
        %272 = vset.pattern.permute.xlu0 0
        %273 = vperm.xlu0 %272, %v224
        %v274 = vpop.permute.xlu0 %273
        %vm275 = vcmp.eq.s32.totalorder %v229, %v226
        %vm276 = vcmp.eq.s32.totalorder %v232, %v226
        %vm277 = vcmp.eq.s32.totalorder %v235, %v226
        %vm278 = vcmp.eq.s32.totalorder %v238, %v226
        %vm279 = vcmp.eq.s32.totalorder %v241, %v226
        %vm280 = vcmp.eq.s32.totalorder %v244, %v226
        %vm281 = vcmp.eq.s32.totalorder %v247, %v226
        %vm282 = vcmp.eq.s32.totalorder %v250, %v226
        %vm283 = vcmp.eq.s32.totalorder %v253, %v226
        %vm284 = vcmp.eq.s32.totalorder %v256, %v226
        %vm285 = vcmp.eq.s32.totalorder %v259, %v226
        %vm286 = vcmp.eq.s32.totalorder %v262, %v226
        %vm287 = vcmp.eq.s32.totalorder %v265, %v226
        %vm288 = vcmp.eq.s32.totalorder %v268, %v226
        %vm289 = vcmp.eq.s32.totalorder %v271, %v226
        %vm290 = vcmp.eq.s32.totalorder %v274, %v226
        %v291 = vsel %vm275, 1, 0
        %v292 = vsel %vm276, 1, 0
        %v293 = vsel %vm277, 1, 0
        %v294 = vsel %vm278, 1, 0
        %v295 = vsel %vm279, 1, 0
        %v296 = vsel %vm280, 1, 0
        %v297 = vsel %vm281, 1, 0
        %v298 = vsel %vm282, 1, 0
        %v299 = vsel %vm283, 1, 0
        %v300 = vsel %vm284, 1, 0
        %v301 = vsel %vm285, 1, 0
        %v302 = vsel %vm286, 1, 0
        %v303 = vsel %vm287, 1, 0
        %v304 = vsel %vm288, 1, 0
        %v305 = vsel %vm289, 1, 0
        %v306 = vsel %vm290, 1, 0
        %v307 = vcvt.s32.f32 %v291
        %v308 = vcvt.s32.f32 %v292
        %v309 = vcvt.s32.f32 %v293
        %v310 = vcvt.s32.f32 %v294
        %v311 = vcvt.s32.f32 %v295
        %v312 = vcvt.s32.f32 %v296
        %v313 = vcvt.s32.f32 %v297
        %v314 = vcvt.s32.f32 %v298
        %v315 = vcvt.s32.f32 %v299
        %v316 = vcvt.s32.f32 %v300
        %v317 = vcvt.s32.f32 %v301
        %v318 = vcvt.s32.f32 %v302
        %v319 = vcvt.s32.f32 %v303
        %v320 = vcvt.s32.f32 %v304
        %v321 = vcvt.s32.f32 %v305
        %v322 = vcvt.s32.f32 %v306
        %v323 = vld [vmem:[#allocation2] sm:$0xff]
        %v324 = vld [vmem:[#allocation2 + $0x8] sm:$0xff]
        %vm325 = vcmask 130048
        %v327 = vsel %vm325, %v307, 0
        %v330 = vsel %vm325, %v308, 0
        %v333 = vsel %vm325, %v309, 0
        %v336 = vsel %vm325, %v310, 0
        %v339 = vsel %vm325, %v311, 0
        %v342 = vsel %vm325, %v312, 0
        %v345 = vsel %vm325, %v313, 0
        %v348 = vsel %vm325, %v314, 0
        %v351 = vsel %vm325, %v315, 0
        %v354 = vsel %vm325, %v316, 0
        %v357 = vsel %vm325, %v317, 0
        %v360 = vsel %vm325, %v318, 0
        %v363 = vsel %vm325, %v319, 0
        %v366 = vsel %vm325, %v320, 0
        %v369 = vsel %vm325, %v321, 0
        %v372 = vsel %vm325, %v322, 0
        %374 = vmatprep.subr.mxu0 0.0
        %375 = vmatpush1.msra.mxu0 %v323
        %376 = vmatprep.subr.mxu0 0.0
        %377 = vmatpush1.msra.mxu0 %v324
        %378 = vmatprep.subr.mxu0 0.0
        %379 = vmatpush1.msra.mxu0 0.0
        %380 = vmatprep.subr.mxu0 0.0
        %381 = vmatpush1.msra.mxu0 0.0
        %382 = vmatprep.subr.mxu0 0.0
        %383 = vmatpush1.msra.mxu0 0.0
        %384 = vmatprep.subr.mxu0 0.0
        %385 = vmatpush1.msra.mxu0 0.0
        %386 = vmatprep.subr.mxu0 0.0
        %387 = vmatpush1.msra.mxu0 0.0
        %388 = vmatprep.subr.mxu0 0.0
        %389 = vmatpush1.msra.mxu0 0.0
        %390 = vmatprep.subr.mxu0 0.0
        %391 = vmatpush1.msra.mxu0 0.0
        %392 = vmatprep.subr.mxu0 0.0
        %393 = vmatpush1.msra.mxu0 0.0
        %394 = vmatprep.subr.mxu0 0.0
        %395 = vmatpush1.msra.mxu0 0.0
        %396 = vmatprep.subr.mxu0 0.0
        %397 = vmatpush1.msra.mxu0 0.0
        %398 = vmatprep.subr.mxu0 0.0
        %399 = vmatpush1.msra.mxu0 0.0
        %400 = vmatprep.subr.mxu0 0.0
        %401 = vmatpush1.msra.mxu0 0.0
        %402 = vmatprep.subr.mxu0 0.0
        %403 = vmatpush1.msra.mxu0 0.0
        %404 = vmatprep.subr.mxu0 0.0
        %405 = vmatpush1.msra.mxu0 0.0
        %406 = vmatprep.subr.mxu0 0.0
        %407 = vmatpush1.msra.mxu0 0.0
        %408 = vmatprep.subr.mxu0 0.0
        %409 = vmatpush1.msra.mxu0 0.0
        %410 = vmatprep.subr.mxu0 0.0
        %411 = vmatpush1.msra.mxu0 0.0
        %412 = vmatprep.subr.mxu0 0.0
        %413 = vmatpush1.msra.mxu0 0.0
        %414 = vmatprep.subr.mxu0 0.0
        %415 = vmatpush1.msra.mxu0 0.0
        %416 = vmatprep.subr.mxu0 0.0
        %417 = vmatpush1.msra.mxu0 0.0
        %418 = vmatprep.subr.mxu0 0.0
        %419 = vmatpush1.msra.mxu0 0.0
        %420 = vmatprep.subr.mxu0 0.0
        %421 = vmatpush1.msra.mxu0 0.0
        %422 = vmatprep.subr.mxu0 0.0
        %423 = vmatpush1.msra.mxu0 0.0
        %424 = vmatprep.subr.mxu0 0.0
        %425 = vmatpush1.msra.mxu0 0.0
        %426 = vmatprep.subr.mxu0 0.0
        %427 = vmatpush1.msra.mxu0 0.0
        %428 = vmatprep.subr.mxu0 0.0
        %429 = vmatpush1.msra.mxu0 0.0
        %430 = vmatprep.subr.mxu0 0.0
        %431 = vmatpush1.msra.mxu0 0.0
        %432 = vmatprep.subr.mxu0 0.0
        %433 = vmatpush1.msra.mxu0 0.0
        %434 = vmatprep.subr.mxu0 0.0
        %435 = vmatpush1.msra.mxu0 0.0
        %436 = vmatprep.subr.mxu0 0.0
        %437 = vmatpush1.msra.mxu0 0.0
        %438 = vmatprep.mubr.f32.mxu0 0.0
        %439 = vmatmul.mubr.f32.gmra.mrb[0].mxu0 %v327
        %v440 = vpop.f32.mrb[0].mxu0
        %v441 = vadd.f32 0.0, %v440
        %v442 = vpop.f32.mrb[0].mxu0
        %443 = vmatprep.mubr.f32.mxu0 0.0
        %444 = vmatmul.mubr.f32.gmra.mrb[0].mxu0 %v330
        %v445 = vpop.f32.mrb[0].mxu0
        %v446 = vadd.f32 0.0, %v445
        %v447 = vpop.f32.mrb[0].mxu0
        %448 = vmatprep.mubr.f32.mxu0 0.0
        %449 = vmatmul.mubr.f32.gmra.mrb[0].mxu0 %v333
        %v450 = vpop.f32.mrb[0].mxu0
        %v451 = vadd.f32 0.0, %v450
        %v452 = vpop.f32.mrb[0].mxu0
        %453 = vmatprep.mubr.f32.mxu0 0.0
        %454 = vmatmul.mubr.f32.gmra.mrb[0].mxu0 %v336
        %v455 = vpop.f32.mrb[0].mxu0
        %v456 = vadd.f32 0.0, %v455
        %v457 = vpop.f32.mrb[0].mxu0
        %458 = vmatprep.mubr.f32.mxu0 0.0
        %459 = vmatmul.mubr.f32.gmra.mrb[0].mxu0 %v339
        %v460 = vpop.f32.mrb[0].mxu0
        %v461 = vadd.f32 0.0, %v460
        %v462 = vpop.f32.mrb[0].mxu0
        %463 = vmatprep.mubr.f32.mxu0 0.0
        %464 = vmatmul.mubr.f32.gmra.mrb[0].mxu0 %v342
        %v465 = vpop.f32.mrb[0].mxu0
        %v466 = vadd.f32 0.0, %v465
        %v467 = vpop.f32.mrb[0].mxu0
        %468 = vmatprep.mubr.f32.mxu0 0.0
        %469 = vmatmul.mubr.f32.gmra.mrb[0].mxu0 %v345
        %v470 = vpop.f32.mrb[0].mxu0
        %v471 = vadd.f32 0.0, %v470
        %v472 = vpop.f32.mrb[0].mxu0
        %473 = vmatprep.mubr.f32.mxu0 0.0
        %474 = vmatmul.mubr.f32.gmra.mrb[0].mxu0 %v348
        %v475 = vpop.f32.mrb[0].mxu0
        %v476 = vadd.f32 0.0, %v475
        %v477 = vpop.f32.mrb[0].mxu0
        %478 = vmatprep.mubr.f32.mxu0 0.0
        %479 = vmatmul.mubr.f32.gmra.mrb[0].mxu0 %v351
        %v480 = vpop.f32.mrb[0].mxu0
        %v481 = vadd.f32 0.0, %v480
        %v482 = vpop.f32.mrb[0].mxu0
        %483 = vmatprep.mubr.f32.mxu0 0.0
        %484 = vmatmul.mubr.f32.gmra.mrb[0].mxu0 %v354
        %v485 = vpop.f32.mrb[0].mxu0
        %v486 = vadd.f32 0.0, %v485
        %v487 = vpop.f32.mrb[0].mxu0
        %488 = vmatprep.mubr.f32.mxu0 0.0
        %489 = vmatmul.mubr.f32.gmra.mrb[0].mxu0 %v357
        %v490 = vpop.f32.mrb[0].mxu0
        %v491 = vadd.f32 0.0, %v490
        %v492 = vpop.f32.mrb[0].mxu0
        %493 = vmatprep.mubr.f32.mxu0 0.0
        %494 = vmatmul.mubr.f32.gmra.mrb[0].mxu0 %v360
        %v495 = vpop.f32.mrb[0].mxu0
        %v496 = vadd.f32 0.0, %v495
        %v497 = vpop.f32.mrb[0].mxu0
        %498 = vmatprep.mubr.f32.mxu0 0.0
        %499 = vmatmul.mubr.f32.gmra.mrb[0].mxu0 %v363
        %v500 = vpop.f32.mrb[0].mxu0
        %v501 = vadd.f32 0.0, %v500
        %v502 = vpop.f32.mrb[0].mxu0
        %503 = vmatprep.mubr.f32.mxu0 0.0
        %504 = vmatmul.mubr.f32.gmra.mrb[0].mxu0 %v366
        %v505 = vpop.f32.mrb[0].mxu0
        %v506 = vadd.f32 0.0, %v505
        %v507 = vpop.f32.mrb[0].mxu0
        %508 = vmatprep.mubr.f32.mxu0 0.0
        %509 = vmatmul.mubr.f32.gmra.mrb[0].mxu0 %v369
        %v510 = vpop.f32.mrb[0].mxu0
        %v511 = vadd.f32 0.0, %v510
        %v512 = vpop.f32.mrb[0].mxu0
        %513 = vmatprep.mubr.f32.mxu0 0.0
        %514 = vmatmul.mubr.f32.gmra.mrb[0].mxu0 %v372
        %v515 = vpop.f32.mrb[0].mxu0
        %v516 = vadd.f32 0.0, %v515
        %v517 = vpop.f32.mrb[0].mxu0
        %518 = vdwg.mxu0
        %v519 = vld [vmem:[%s206] sm:$0xff]
        %v520 = vld [vmem:[%s206 + $0x8] sm:$0xff]
        %v521 = vld [vmem:[%s206 + $0x10] sm:$0xff]
        %v522 = vld [vmem:[%s206 + $0x18] sm:$0xff]
        %v523 = vld [vmem:[%s206 + $0x20] sm:$0xff]
        %v524 = vld [vmem:[%s206 + $0x28] sm:$0xff]
        %v525 = vld [vmem:[%s206 + $0x30] sm:$0xff]
        %v526 = vld [vmem:[%s206 + $0x38] sm:$0xff]
        %v527 = vld [vmem:[%s206 + $0x40] sm:$0xff]
        %v528 = vld [vmem:[%s206 + $0x48] sm:$0xff]
        %v529 = vld [vmem:[%s206 + $0x50] sm:$0xff]
        %v530 = vld [vmem:[%s206 + $0x58] sm:$0xff]
        %v531 = vld [vmem:[%s206 + $0x60] sm:$0xff]
        %v532 = vld [vmem:[%s206 + $0x68] sm:$0xff]
        %v533 = vld [vmem:[%s206 + $0x70] sm:$0xff]
        %v534 = vld [vmem:[%s206 + $0x78] sm:$0xff]
        %v535 = vmul.f32 %v441, %v519
        %v536 = vmul.f32 %v446, %v520
        %v537 = vmul.f32 %v451, %v521
        %v538 = vmul.f32 %v456, %v522
        %v539 = vmul.f32 %v461, %v523
        %v540 = vmul.f32 %v466, %v524
        %v541 = vmul.f32 %v471, %v525
        %v542 = vmul.f32 %v476, %v526
        %v543 = vmul.f32 %v481, %v527
        %v544 = vmul.f32 %v486, %v528
        %v545 = vmul.f32 %v491, %v529
        %v546 = vmul.f32 %v496, %v530
        %v547 = vmul.f32 %v501, %v531
        %v548 = vmul.f32 %v506, %v532
        %v549 = vmul.f32 %v511, %v533
        %v550 = vmul.f32 %v516, %v534
        %551 = vst [vmem:[%s195] sm:$0xff] %v535
        %552 = vst [vmem:[%s195 + $0x8] sm:$0xff] %v536
        %553 = vst [vmem:[%s195 + $0x10] sm:$0xff] %v537
        %554 = vst [vmem:[%s195 + $0x18] sm:$0xff] %v538
        %555 = vst [vmem:[%s195 + $0x20] sm:$0xff] %v539
        %556 = vst [vmem:[%s195 + $0x28] sm:$0xff] %v540
        %557 = vst [vmem:[%s195 + $0x30] sm:$0xff] %v541
        %558 = vst [vmem:[%s195 + $0x38] sm:$0xff] %v542
        %559 = vst [vmem:[%s195 + $0x40] sm:$0xff] %v543
        %560 = vst [vmem:[%s195 + $0x48] sm:$0xff] %v544
        %561 = vst [vmem:[%s195 + $0x50] sm:$0xff] %v545
        %562 = vst [vmem:[%s195 + $0x58] sm:$0xff] %v546
        %563 = vst [vmem:[%s195 + $0x60] sm:$0xff] %v547
        %564 = vst [vmem:[%s195 + $0x68] sm:$0xff] %v548
        %565 = vst [vmem:[%s195 + $0x70] sm:$0xff] %v549
        %566 = vst [vmem:[%s195 + $0x78] sm:$0xff] %v550
        %s567 = sand.u32 %s99, 1
        %s568 = scalar_lea.sflag [#allocation4], %s567
        %s569 = sand.u32 %s99, 1
        %s570 = smul.addr %s569, 128
        %s571 = scalar_lea.vmem [#allocation5], %s570
        // Predicated region
        $region37: #{tpu_custom_call.1} parent=31 // pred_check
          %p572 = pneg %p109
        $region38: #{tpu_custom_call.1} parent=31 // pred_check_branch
          %574 = sbr.rel (%p572) target = $region40
        $region39: #{tpu_custom_call.1} parent=31 // pred_region
          %s575 = smul.u32 16, %s18
          %s577 = ssub.s32 2048, 2048
          %578 = vsyncadd %s568, %s577
          %s579 = smul.addr %s575, 128
          %s580 = scalar_lea.hbm %s3, %s579
          %s581 = sshll.u32 %s571, 4
          %s582 = int_to_ptr.vmem [resolvable:$true] %s581
          %587 = dma.vmem_to_hbm [thread:$0]  %s582, 2048, %s580, %s568, 128, 128, 8
        $region40: #{tpu_custom_call.1} parent=31 // pred_fallthru
          _
      $region32: #{tpu_custom_call.1} parent=5 // pred_fallthru
        _
      %p588 = scmp.le.s32.totalorder 2, %s13
      // Predicated region
      $region41: #{tpu_custom_call.1} parent=5 // pred_check
        %p589 = pneg %p588
      $region42: #{tpu_custom_call.1} parent=5 // pred_check_branch
        %591 = sbr.rel (%p589) target = $region44
      $region43: #{tpu_custom_call.1} parent=5 // pred_region
        %s592 = ssub.s32 %s13, 2
        // Predicated region
        $region45: #{tpu_custom_call.1} parent=43 // pred_check
          %p593 = pneg %p115
        $region46: #{tpu_custom_call.1} parent=43 // pred_check_branch
          %595 = sbr.rel (%p593) target = $region48
        $region47: #{tpu_custom_call.1} parent=43 // pred_region
          %s596 = sand.u32 %s100, 1
          %s597 = scalar_lea.sflag [#allocation4], %s596
          %s598 = sand.u32 %s100, 1
          %s599 = smul.addr %s598, 128
          %s600 = scalar_lea.vmem [#allocation5], %s599
          %601 = dma.done %s597, 2048
        $region48: #{tpu_custom_call.1} parent=43 // pred_fallthru
          _
      $region44: #{tpu_custom_call.1} parent=5 // pred_fallthru
        _
    $region6: #{tpu_custom_call.1} parent=1 // loop_footer
      %s17 = sadd.s32 1, %s13
    $region7: #{tpu_custom_call.1} parent=1 // loop_footer_branch
      %12 = sbr.rel target = $region3
    $region8: #{tpu_custom_call.1} parent=1 // loop_exit
      _
    %602 = vsyncpa [#allocation3], 1
    %s603 = scalar_lea.sflag [#allocation3], 1
    %604 = vsyncpa %s603, 1
    %605 = vsyncpa [#allocation4], 1
    %s606 = scalar_lea.sflag [#allocation4], 1
    %607 = vsyncpa %s606, 1

</llo_original>
